<compile_context>
chip_gen: v7x
topology: tpu7x:2x2x1
jax: 0.10.0
libtpu: 0.0.40
codegen_flags: <defaults>
</compile_context>

<pallas_src>
import functools

import jax
import jax.numpy as jnp
from jax import lax
from jax.experimental import pallas as pl
from jax.experimental.pallas import tpu as pltpu

NEG_BIG = -10000000000.0     # same magnitude the PyTorch module uses
_INIT_MAX = -1e30            # finite "-inf" for the online-softmax running max


def _round_up(x, m):
    return ((x + m - 1) // m) * m


def _attn_span_kernel(first_blk_ref, n_blk_ref,                       # scalar prefetch (SMEM)
                      x_ref, s_ref, e_ref, wp_ref, bp_ref, wa_ref, ba_ref,   # inputs
                      out_ref,                                         # output
                      m_ref, l_ref, acc_ref, hs_ref, he_ref,           # VMEM scratch
                      *, use_proj, use_endpoints, seq_len):
    g = pl.program_id(0)            # batch block
    t = pl.program_id(1)            # (virtual) sequence block step
    n_t = pl.num_programs(1)

    n_blk = n_blk_ref[g]
    # Sequence block actually mapped by the x index_map at this step.  Trailing
    # (skipped) steps are clamped to the last active block so no extra DMA runs.
    t_blk = first_blk_ref[g] + jnp.minimum(t, n_blk - 1)

    @pl.when(t == 0)
    def _init():
        m_ref[...] = jnp.full_like(m_ref, _INIT_MAX)
        l_ref[...] = jnp.zeros_like(l_ref)
        acc_ref[...] = jnp.zeros_like(acc_ref)
        if use_endpoints:
            hs_ref[...] = jnp.zeros_like(hs_ref)
            he_ref[...] = jnp.zeros_like(he_ref)

    @pl.when(t < n_blk)
    def _accumulate():
        x3 = x_ref[...]                                   # [Bb, Tt, D] compute dtype
        Bb, Tt, D = x3.shape
        Pp = acc_ref.shape[-1]

        if use_proj:
            # One MXU matmul with M = Bb*Tt rows; f32 accumulation.
            h2 = jnp.dot(x3.reshape(Bb * Tt, D), wp_ref[...],
                         preferred_element_type=jnp.float32) + bp_ref[...]
            h3 = h2.reshape(Bb, Tt, Pp)                   # [Bb, Tt, Pp] f32
        else:
            h3 = x3                                       # stay in compute dtype (bf16 ok)

        # Attention logits, lane-major [Bb, Tt]; wa/ba are f32 so the product
        # promotes to f32 without an explicit full-tile f32 copy of x.
        raw = jnp.sum(h3 * wa_ref[...], axis=-1) + ba_ref[...]

        s_col = s_ref[...]                                # [Bb, 1] int32
        e_col = e_ref[...]
        t_idx = t_blk * Tt + lax.broadcasted_iota(jnp.int32, (Bb, Tt), 1)
        in_span = jnp.logical_and(t_idx >= s_col, t_idx <= e_col)
        logits = jnp.where(in_span, raw, NEG_BIG)         # single vselect

        # Online softmax update (all f32).
        m_prev = m_ref[...]                               # [Bb, 1]
        m_new = jnp.maximum(m_prev, jnp.max(logits, axis=-1, keepdims=True))
        alpha = jnp.exp(m_prev - m_new)                   # [Bb, 1]
        p = jnp.exp(logits - m_new)                       # [Bb, Tt]
        l_ref[...] = alpha * l_ref[...] + jnp.sum(p, axis=-1, keepdims=True)
        # Attention-pooled contribution: VPU broadcast-multiply + T(sublane)
        # axis reduction (no tiny-M batched MXU matmul, no [Bb,3,T] stack).
        acc_ref[...] = alpha * acc_ref[...] + jnp.sum(p[:, :, None] * h3, axis=1)
        m_ref[...] = m_new

        if use_endpoints:
            # One-hot gathers of h[start] / h[end]; ids clamped like
            # take_along_axis.  Each one-hot hits exactly one token over the
            # whole sequence, so plain accumulation (no rescale) is exact.
            s_g = jnp.clip(s_col, 0, seq_len - 1)
            e_g = jnp.clip(e_col, 0, seq_len - 1)
            sel_s = (t_idx == s_g).astype(jnp.float32)    # [Bb, Tt]
            sel_e = (t_idx == e_g).astype(jnp.float32)
            hs_ref[...] += jnp.sum(sel_s[:, :, None] * h3, axis=1)
            he_ref[...] += jnp.sum(sel_e[:, :, None] * h3, axis=1)

    @pl.when(t == n_t - 1)
    def _finalize():
        Pp = acc_ref.shape[-1]
        l = l_ref[...]
        inv = pl.reciprocal(l, approx=True)               # EUP, off the VPU path
        inv = inv * (2.0 - l * inv)                       # one Newton step -> ~f32 exact
        attn = acc_ref[...] * inv
        if use_endpoints:
            # Lane-dense, unmasked slice stores (Pp is a multiple of 128).
            out_ref[:, 0:Pp] = hs_ref[...].astype(out_ref.dtype)
            out_ref[:, Pp:2 * Pp] = he_ref[...].astype(out_ref.dtype)
            out_ref[:, 2 * Pp:3 * Pp] = attn.astype(out_ref.dtype)
        else:
            out_ref[...] = attn.astype(out_ref.dtype)


def attn_span_repr(encoded_input, start_ids, end_ids, params, *,
                   use_proj=False, use_endpoints=False,
                   block_b=8, block_t=128,
                   compute_dtype=jnp.bfloat16, vmem_limit_bytes=None):
    """Pallas forward of AttnSpanRepr.

    encoded_input: [B, T, D] float; start_ids / end_ids: [B] int.
    params: proj_w [D, P] (= torch weight.T), proj_b [1, P],
            attn_w [1, A] (A = P if use_proj else D), attn_b [1, 1].

    block_b / block_t / vmem_limit_bytes are the per-chip tuning knobs: raise
    block_b (and vmem_limit_bytes) on v5e/v6e (128 MiB VMEM), keep the tile
    budget under ~half of 64 MiB on v7x and make sure the batch grid has >= 2
    steps so both TensorCores are fed.
    """
    B, T, D = encoded_input.shape
    compute_dtype = jnp.dtype(compute_dtype)
    f32 = jnp.float32

    P = params["proj_w"].shape[1] if use_proj else D
    Pp = _round_up(P, 128)                    # lane-dense output slices
    out_pad = 3 * Pp if use_endpoints else Pp

    x = encoded_input.astype(compute_dtype)
    if use_proj:
        wp = jnp.zeros((D, Pp), f32).at[:, :P].set(params["proj_w"]).astype(compute_dtype)
        bp = jnp.zeros((1, Pp), f32).at[:, :P].set(params["proj_b"])
        wa = jnp.zeros((1, Pp), f32).at[:, :P].set(params["attn_w"])
        d_eff = D
    else:
        d_eff = Pp                            # pad x lanes so pooling/stores stay lane-dense
        if d_eff != D:
            x = jnp.pad(x, ((0, 0), (0, 0), (0, d_eff - D)))
        wp = jnp.zeros((1, 1), compute_dtype)  # dummies (unused)
        bp = jnp.zeros((1, 1), f32)
        wa = jnp.zeros((1, d_eff), f32).at[:, :D].set(params["attn_w"])
    ba = params["attn_b"].astype(f32).reshape(1, 1)

    # --- batch / sequence tiling --------------------------------------------
    Bb = _round_up(max(block_b, 8), 8)
    Bp = _round_up(B, Bb)
    pack = 16 if compute_dtype.itemsize == 2 else 8       # sublane packing
    Tt = _round_up(min(block_t, T), pack)
    Tp = _round_up(T, Tt)

    if Bp != B or Tp != T:
        x = jnp.pad(x, ((0, Bp - B), (0, Tp - T), (0, 0)))
    # Padded batch rows get an empty span (start > end) so they stay inert and
    # never widen the per-block active sequence range.
    s2 = jnp.pad(start_ids.astype(jnp.int32), (0, Bp - B),
                 constant_values=max(T - 1, 0)).reshape(Bp, 1)
    e2 = jnp.pad(end_ids.astype(jnp.int32), (0, Bp - B),
                 constant_values=0).reshape(Bp, 1)

    # Scalar-prefetched per-batch-block range of sequence blocks overlapping the
    # union of the block's spans: only these blocks are DMA'd / computed.
    n_g = Bp // Bb
    s_clip = jnp.clip(s2[:, 0], 0, T - 1).reshape(n_g, Bb)
    e_clip = jnp.clip(e2[:, 0], 0, T - 1).reshape(n_g, Bb)
    first_blk = (jnp.min(s_clip, axis=1) // Tt).astype(jnp.int32)
    last_blk = (jnp.max(e_clip, axis=1) // Tt).astype(jnp.int32)
    last_blk = jnp.maximum(last_blk, first_blk)
    n_blk = (last_blk - first_blk + 1).astype(jnp.int32)

    kernel = functools.partial(_attn_span_kernel, use_proj=use_proj,
                               use_endpoints=use_endpoints, seq_len=T)

    out = pl.pallas_call(
        kernel,
        out_shape=jax.ShapeDtypeStruct((Bp, out_pad), f32),
        grid_spec=pltpu.PrefetchScalarGridSpec(
            num_scalar_prefetch=2,
            grid=(n_g, Tp // Tt),
            in_specs=[
                pl.BlockSpec(
                    (Bb, Tt, d_eff),
                    lambda g, t, fb, nb: (g, fb[g] + jnp.minimum(t, nb[g] - 1), 0)),
                pl.BlockSpec((Bb, 1), lambda g, t, fb, nb: (g, 0)),      # start ids
                pl.BlockSpec((Bb, 1), lambda g, t, fb, nb: (g, 0)),      # end ids
                pl.BlockSpec(wp.shape, lambda g, t, fb, nb: (0, 0)),     # proj W
                pl.BlockSpec(bp.shape, lambda g, t, fb, nb: (0, 0)),     # proj b
                pl.BlockSpec(wa.shape, lambda g, t, fb, nb: (0, 0)),     # attn w
                pl.BlockSpec(ba.shape, lambda g, t, fb, nb: (0, 0)),     # attn b
            ],
            out_specs=pl.BlockSpec((Bb, out_pad), lambda g, t, fb, nb: (g, 0)),
            scratch_shapes=[
                pltpu.VMEM((Bb, 1), f32),        # running max m
                pltpu.VMEM((Bb, 1), f32),        # running denominator l
                pltpu.VMEM((Bb, Pp), f32),       # attention-pooled accumulator
                pltpu.VMEM((Bb, Pp), f32),       # h_start accumulator
                pltpu.VMEM((Bb, Pp), f32),       # h_end accumulator
            ]),
        compiler_params=pltpu.CompilerParams(
            dimension_semantics=("parallel", "arbitrary"),
            vmem_limit_bytes=vmem_limit_bytes),
    )(first_blk, n_blk, x, s2, e2, wp, bp, wa, ba)

    if use_endpoints:
        return jnp.concatenate(
            [out[:B, 0:P], out[:B, Pp:Pp + P], out[:B, 2 * Pp:2 * Pp + P]], axis=1)
    return out[:B, :P]


def _reference(encoded_input, start_ids, end_ids, params, *,
               use_proj, use_endpoints):
    """Pure-JAX f32 reference mirroring the PyTorch forward."""
    x = encoded_input
    if use_proj:
        x = x @ params["proj_w"] + params["proj_b"]                   # [B, T, P]
    B, T, P = x.shape
    t = jnp.arange(T)[None, :]
    span_mask = ((t >= start_ids[:, None]) & (t <= end_ids[:, None])
                 ).astype(jnp.float32)[..., None]                     # [B, T, 1]
    attn_mask = (1.0 - span_mask) * NEG_BIG
    logits = jnp.einsum("btp,p->bt", x, params["attn_w"][0])[..., None] \
        + params["attn_b"][0, 0] + attn_mask
    wts = jax.nn.softmax(logits, axis=1)
    attn_term = jnp.sum(wts * x, axis=1)                              # [B, P]
    if use_endpoints:
        h_start = jnp.take_along_axis(x, start_ids[:, None, None], axis=1)[:, 0]
        h_end = jnp.take_along_axis(x, end_ids[:, None, None], axis=1)[:, 0]
        return jnp.concatenate([h_start, h_end, attn_term], axis=1)
    return attn_term


if __name__ == "__main__":
    B, T, D, P = 16, 24, 32, 16

    key = jax.random.PRNGKey(0)
    k_x, k_wp, k_bp, k_wa, k_ba, k_s, k_len = jax.random.split(key, 7)

    encoded_input = jax.random.normal(k_x, (B, T, D), jnp.float32)
    start_ids = jax.random.randint(k_s, (B,), 0, T // 2).astype(jnp.int32)
    span_len = jax.random.randint(k_len, (B,), 0, T // 2).astype(jnp.int32)
    end_ids = jnp.minimum(start_ids + span_len, T - 1).astype(jnp.int32)

    def make_params(use_proj):
        a_dim = P if use_proj else D
        return {
            "proj_w": jax.random.normal(k_wp, (D, P), jnp.float32) * 0.1,  # torch weight.T
            "proj_b": jax.random.normal(k_bp, (1, P), jnp.float32) * 0.1,
            "attn_w": jax.random.normal(k_wa, (1, a_dim), jnp.float32) * 0.1,
            "attn_b": jax.random.normal(k_ba, (1, 1), jnp.float32) * 0.1,
        }

    # bf16 (default) runs: compare against a reference fed bf16-rounded x /
    # proj_w so the only differences are f32 accumulation-order level.
    x_bf = encoded_input.astype(jnp.bfloat16).astype(jnp.float32)
    for use_proj in (False, True):
        for use_endpoints in (False, True):
            params = make_params(use_proj)
            out = attn_span_repr(encoded_input, start_ids, end_ids, params,
                                 use_proj=use_proj, use_endpoints=use_endpoints,
                                 block_b=8, block_t=16)
            out = jax.block_until_ready(out)
            ref_params = dict(params)
            ref_params["proj_w"] = params["proj_w"].astype(jnp.bfloat16).astype(jnp.float32)
            ref = _reference(x_bf, start_ids, end_ids, ref_params,
                             use_proj=use_proj, use_endpoints=use_endpoints)
            a_dim = P if use_proj else D
            exp_dim = 3 * a_dim if use_endpoints else a_dim
            assert out.shape == (B, exp_dim), out.shape
            assert jnp.allclose(out, ref, atol=1e-2, rtol=1e-2), \
                f"bf16 mismatch (use_proj={use_proj}, use_endpoints={use_endpoints})"

    # f32 run (no projection -> no MXU): tight check of the masked online
    # softmax, span-limited block walk, pooling and endpoint gathers.
    params = make_params(False)
    out = attn_span_repr(encoded_input, start_ids, end_ids, params,
                         use_proj=False, use_endpoints=True,
                         block_b=8, block_t=16, compute_dtype=jnp.float32)
    out = jax.block_until_ready(out)
    ref = _reference(encoded_input, start_ids, end_ids, params,
                     use_proj=False, use_endpoints=True)
    assert out.shape == (B, 3 * D)
    assert jnp.allclose(out, ref, atol=1e-4, rtol=1e-4), "f32 mismatch vs reference"

    print("KERNEL_OK")
</pallas_src>

<mosaic_0001>
module attributes {stable_mosaic.version = 11 : i64} {
  func.func @_attn_span_kernel(%arg0: i32, %arg1: i32, %arg2: memref<2xi32, #tpu.memory_space<smem>>, %arg3: memref<2xi32, #tpu.memory_space<smem>>, %arg4: memref<8x16x128xbf16, #tpu.memory_space<vmem>>, %arg5: memref<8x1xi32, #tpu.memory_space<vmem>>, %arg6: memref<8x1xi32, #tpu.memory_space<vmem>>, %arg7: memref<1x1xbf16, #tpu.memory_space<vmem>>, %arg8: memref<1x1xf32, #tpu.memory_space<vmem>>, %arg9: memref<1x128xf32, #tpu.memory_space<vmem>>, %arg10: memref<1x1xf32, #tpu.memory_space<vmem>>, %arg11: memref<8x128xf32, #tpu.memory_space<vmem>>, %arg12: memref<8x1xf32, #tpu.memory_space<vmem>>, %arg13: memref<8x1xf32, #tpu.memory_space<vmem>>, %arg14: memref<8x128xf32, #tpu.memory_space<vmem>>, %arg15: memref<8x128xf32, #tpu.memory_space<vmem>>, %arg16: memref<8x128xf32, #tpu.memory_space<vmem>>) attributes {dimension_semantics = [#tpu.dimension_semantics<parallel>, #tpu.dimension_semantics<arbitrary>], iteration_bounds = array<i64: 2, 2>, scalar_prefetch = 2 : i64, scratch_operands = 5 : i64, tpu.core_type = #tpu.core_type<tc>, window_params = [{transform_indices = @transform_0, window_bounds = array<i64: 8, 16, 128>}, {transform_indices = @transform_1, window_bounds = array<i64: 8, 1>}, {transform_indices = @transform_2, window_bounds = array<i64: 8, 1>}, {pipeline_mode = #tpu.pipeline_mode<synchronous>, transform_indices = @transform_3, window_bounds = array<i64: 1, 1>}, {pipeline_mode = #tpu.pipeline_mode<synchronous>, transform_indices = @transform_4, window_bounds = array<i64: 1, 1>}, {pipeline_mode = #tpu.pipeline_mode<synchronous>, transform_indices = @transform_5, window_bounds = array<i64: 1, 128>}, {pipeline_mode = #tpu.pipeline_mode<synchronous>, transform_indices = @transform_6, window_bounds = array<i64: 1, 1>}, {transform_indices = @transform_7, window_bounds = array<i64: 8, 128>}]} {
    %0 = arith.index_cast %arg0 : i32 to index
    %1 = memref.load %arg3[%0] : memref<2xi32, #tpu.memory_space<smem>>
    %2 = arith.index_cast %arg0 : i32 to index
    %3 = memref.load %arg2[%2] : memref<2xi32, #tpu.memory_space<smem>>
    %c1_i32 = arith.constant 1 : i32
    %4 = arith.subi %1, %c1_i32 : i32
    %5 = arith.minsi %arg1, %4 : i32
    %6 = arith.addi %3, %5 : i32
    %c0_i32 = arith.constant 0 : i32
    %7 = arith.cmpi eq, %arg1, %c0_i32 : i32
    %8 = arith.extui %7 : i1 to i32
    %c0_i32_0 = arith.constant 0 : i32
    %9 = arith.cmpi ne, %8, %c0_i32_0 : i32
    scf.if %9 {
      %cst = arith.constant -1.000000e+30 : f32
      %16 = vector.broadcast %cst : f32 to vector<8x1xf32>
      %c0 = arith.constant 0 : index
      %c0_4 = arith.constant 0 : index
      %17 = vector.load %arg12[%c0, %c0_4] : memref<8x1xf32, #tpu.memory_space<vmem>>, vector<8x1xf32>
      tpu.vector_store %arg12[%c0, %c0_4], %16 {strides = array<i32>} : memref<8x1xf32, #tpu.memory_space<vmem>>, vector<8x1xf32>,
      %cst_5 = arith.constant 0.000000e+00 : f32
      %18 = vector.broadcast %cst_5 : f32 to vector<8x1xf32>
      %c0_6 = arith.constant 0 : index
      %c0_7 = arith.constant 0 : index
      %19 = vector.load %arg13[%c0_6, %c0_7] : memref<8x1xf32, #tpu.memory_space<vmem>>, vector<8x1xf32>
      tpu.vector_store %arg13[%c0_6, %c0_7], %18 {strides = array<i32>} : memref<8x1xf32, #tpu.memory_space<vmem>>, vector<8x1xf32>,
      %cst_8 = arith.constant 0.000000e+00 : f32
      %20 = vector.broadcast %cst_8 : f32 to vector<8x128xf32>
      %c0_9 = arith.constant 0 : index
      %c0_10 = arith.constant 0 : index
      %21 = vector.load %arg14[%c0_9, %c0_10] : memref<8x128xf32, #tpu.memory_space<vmem>>, vector<8x128xf32>
      tpu.vector_store %arg14[%c0_9, %c0_10], %20 {strides = array<i32>} : memref<8x128xf32, #tpu.memory_space<vmem>>, vector<8x128xf32>,
    } else {
    }
    %10 = arith.cmpi slt, %arg1, %1 : i32
    %11 = arith.extui %10 : i1 to i32
    %c0_i32_1 = arith.constant 0 : i32
    %12 = arith.cmpi ne, %11, %c0_i32_1 : i32
    scf.if %12 {
      %c0 = arith.constant 0 : index
      %c0_4 = arith.constant 0 : index
      %c0_5 = arith.constant 0 : index
      %16 = vector.load %arg4[%c0, %c0_4, %c0_5] : memref<8x16x128xbf16, #tpu.memory_space<vmem>>, vector<8x16x128xbf16>
      %c0_6 = arith.constant 0 : index
      %c0_7 = arith.constant 0 : index
      %17 = vector.load %arg9[%c0_6, %c0_7] : memref<1x128xf32, #tpu.memory_space<vmem>>, vector<1x128xf32>
      %18 = arith.extf %16 : vector<8x16x128xbf16> to vector<8x16x128xf32>
      %19 = vector.shape_cast %17 : vector<1x128xf32> to vector<1x1x128xf32>
      %20 = vector.broadcast %19 : vector<1x1x128xf32> to vector<8x16x128xf32>
      %21 = arith.mulf %18, %20 : vector<8x16x128xf32>
      %cst = arith.constant dense<0.000000e+00> : vector<8x16xf32>
      %22 = vector.multi_reduction <add>, %21, %cst [2] : vector<8x16x128xf32> to vector<8x16xf32>
      %c0_8 = arith.constant 0 : index
      %c0_9 = arith.constant 0 : index
      %23 = vector.load %arg10[%c0_8, %c0_9] : memref<1x1xf32, #tpu.memory_space<vmem>>, vector<1x1xf32>
      %24 = vector.broadcast %23 : vector<1x1xf32> to vector<8x16xf32>
      %25 = arith.addf %22, %24 : vector<8x16xf32>
      %c0_10 = arith.constant 0 : index
      %c0_11 = arith.constant 0 : index
      %26 = vector.load %arg5[%c0_10, %c0_11] : memref<8x1xi32, #tpu.memory_space<vmem>>, vector<8x1xi32>
      %c0_12 = arith.constant 0 : index
      %c0_13 = arith.constant 0 : index
      %27 = vector.load %arg6[%c0_12, %c0_13] : memref<8x1xi32, #tpu.memory_space<vmem>>, vector<8x1xi32>
      %c16_i32 = arith.constant 16 : i32
      %28 = arith.muli %6, %c16_i32 : i32
      %29 = tpu.iota {dimensions = array<i32: 1>} : vector<8x16xi32>
      %30 = vector.broadcast %28 : i32 to vector<8x16xi32>
      %31 = arith.addi %30, %29 : vector<8x16xi32>
      %32 = vector.broadcast %26 : vector<8x1xi32> to vector<8x16xi32>
      %33 = arith.cmpi sge, %31, %32 : vector<8x16xi32>
      %34 = vector.broadcast %27 : vector<8x1xi32> to vector<8x16xi32>
      %35 = arith.cmpi sle, %31, %34 : vector<8x16xi32>
      %36 = arith.andi %33, %35 : vector<8x16xi1>
      %cst_14 = arith.constant -1.000000e+10 : f32
      %37 = vector.broadcast %cst_14 : f32 to vector<8x16xf32>
      %38 = arith.select %36, %25, %37 : vector<8x16xi1>, vector<8x16xf32>
      %c0_15 = arith.constant 0 : index
      %c0_16 = arith.constant 0 : index
      %39 = vector.load %arg12[%c0_15, %c0_16] : memref<8x1xf32, #tpu.memory_space<vmem>>, vector<8x1xf32>
      %cst_17 = arith.constant dense<0xFF800000> : vector<8xf32>
      %40 = vector.multi_reduction <maximumf>, %38, %cst_17 [1] : vector<8x16xf32> to vector<8xf32>
      %41 = vector.shape_cast %40 : vector<8xf32> to vector<8x1xf32>
      %42 = arith.maximumf %39, %41 : vector<8x1xf32>
      %43 = arith.subf %39, %42 : vector<8x1xf32>
      %44 = math.exp %43 : vector<8x1xf32>
      %45 = vector.broadcast %42 : vector<8x1xf32> to vector<8x16xf32>
      %46 = arith.subf %38, %45 : vector<8x16xf32>
      %47 = math.exp %46 : vector<8x16xf32>
      %c0_18 = arith.constant 0 : index
      %c0_19 = arith.constant 0 : index
      %48 = vector.load %arg13[%c0_18, %c0_19] : memref<8x1xf32, #tpu.memory_space<vmem>>, vector<8x1xf32>
      %49 = arith.mulf %44, %48 : vector<8x1xf32>
      %cst_20 = arith.constant dense<0.000000e+00> : vector<8xf32>
      %50 = vector.multi_reduction <add>, %47, %cst_20 [1] : vector<8x16xf32> to vector<8xf32>
      %51 = vector.shape_cast %50 : vector<8xf32> to vector<8x1xf32>
      %52 = arith.addf %49, %51 : vector<8x1xf32>
      %c0_21 = arith.constant 0 : index
      %c0_22 = arith.constant 0 : index
      %53 = vector.load %arg13[%c0_21, %c0_22] : memref<8x1xf32, #tpu.memory_space<vmem>>, vector<8x1xf32>
      tpu.vector_store %arg13[%c0_21, %c0_22], %52 {strides = array<i32>} : memref<8x1xf32, #tpu.memory_space<vmem>>, vector<8x1xf32>,
      %c0_23 = arith.constant 0 : index
      %c0_24 = arith.constant 0 : index
      %54 = vector.load %arg14[%c0_23, %c0_24] : memref<8x128xf32, #tpu.memory_space<vmem>>, vector<8x128xf32>
      %55 = vector.broadcast %44 : vector<8x1xf32> to vector<8x128xf32>
      %56 = arith.mulf %55, %54 : vector<8x128xf32>
      %57 = vector.shape_cast %47 : vector<8x16xf32> to vector<8x16x1xf32>
      %58 = arith.extf %16 : vector<8x16x128xbf16> to vector<8x16x128xf32>
      %59 = vector.broadcast %57 : vector<8x16x1xf32> to vector<8x16x128xf32>
      %60 = arith.mulf %59, %58 : vector<8x16x128xf32>
      %cst_25 = arith.constant dense<0.000000e+00> : vector<8x128xf32>
      %61 = vector.multi_reduction <add>, %60, %cst_25 [1] : vector<8x16x128xf32> to vector<8x128xf32>
      %62 = arith.addf %56, %61 : vector<8x128xf32>
      %c0_26 = arith.constant 0 : index
      %c0_27 = arith.constant 0 : index
      %63 = vector.load %arg14[%c0_26, %c0_27] : memref<8x128xf32, #tpu.memory_space<vmem>>, vector<8x128xf32>
      tpu.vector_store %arg14[%c0_26, %c0_27], %62 {strides = array<i32>} : memref<8x128xf32, #tpu.memory_space<vmem>>, vector<8x128xf32>,
      %c0_28 = arith.constant 0 : index
      %c0_29 = arith.constant 0 : index
      %64 = vector.load %arg12[%c0_28, %c0_29] : memref<8x1xf32, #tpu.memory_space<vmem>>, vector<8x1xf32>
      tpu.vector_store %arg12[%c0_28, %c0_29], %42 {strides = array<i32>} : memref<8x1xf32, #tpu.memory_space<vmem>>, vector<8x1xf32>,
    } else {
    }
    %c1_i32_2 = arith.constant 1 : i32
    %13 = arith.cmpi eq, %arg1, %c1_i32_2 : i32
    %14 = arith.extui %13 : i1 to i32
    %c0_i32_3 = arith.constant 0 : i32
    %15 = arith.cmpi ne, %14, %c0_i32_3 : i32
    scf.if %15 {
      %c0 = arith.constant 0 : index
      %c0_4 = arith.constant 0 : index
      %16 = vector.load %arg13[%c0, %c0_4] : memref<8x1xf32, #tpu.memory_space<vmem>>, vector<8x1xf32>
      %17 = tpu.reciprocal %16 {approx = true} : vector<8x1xf32> -> vector<8x1xf32>
      %18 = arith.mulf %16, %17 : vector<8x1xf32>
      %cst = arith.constant 2.000000e+00 : f32
      %19 = vector.broadcast %cst : f32 to vector<8x1xf32>
      %20 = arith.subf %19, %18 : vector<8x1xf32>
      %21 = arith.mulf %17, %20 : vector<8x1xf32>
      %c0_5 = arith.constant 0 : index
      %c0_6 = arith.constant 0 : index
      %22 = vector.load %arg14[%c0_5, %c0_6] : memref<8x128xf32, #tpu.memory_space<vmem>>, vector<8x128xf32>
      %23 = vector.broadcast %21 : vector<8x1xf32> to vector<8x128xf32>
      %24 = arith.mulf %22, %23 : vector<8x128xf32>
      %c0_7 = arith.constant 0 : index
      %c0_8 = arith.constant 0 : index
      %25 = vector.load %arg11[%c0_7, %c0_8] : memref<8x128xf32, #tpu.memory_space<vmem>>, vector<8x128xf32>
      tpu.vector_store %arg11[%c0_7, %c0_8], %24 {strides = array<i32>} : memref<8x128xf32, #tpu.memory_space<vmem>>, vector<8x128xf32>,
    } else {
    }
    return
  }
  func.func @transform_0(%arg0: i32, %arg1: i32, %arg2: memref<2xi32, #tpu.memory_space<smem>>, %arg3: memref<2xi32, #tpu.memory_space<smem>>) -> (i32, i32, i32) {
    %0 = arith.index_cast %arg0 : i32 to index
    %1 = memref.load %arg2[%0] : memref<2xi32, #tpu.memory_space<smem>>
    %2 = arith.index_cast %arg0 : i32 to index
    %3 = memref.load %arg3[%2] : memref<2xi32, #tpu.memory_space<smem>>
    %c1_i32 = arith.constant 1 : i32
    %4 = arith.subi %3, %c1_i32 : i32
    %5 = arith.minsi %arg1, %4 : i32
    %6 = arith.addi %1, %5 : i32
    %c0_i32 = arith.constant 0 : i32
    %c0_i32_0 = arith.constant 0 : i32
    return %arg0, %6, %c0_i32 : i32, i32, i32
  }
  func.func @transform_1(%arg0: i32, %arg1: i32, %arg2: memref<2xi32, #tpu.memory_space<smem>>, %arg3: memref<2xi32, #tpu.memory_space<smem>>) -> (i32, i32) {
    %c0_i32 = arith.constant 0 : i32
    %c0_i32_0 = arith.constant 0 : i32
    return %arg0, %c0_i32 : i32, i32
  }
  func.func @transform_2(%arg0: i32, %arg1: i32, %arg2: memref<2xi32, #tpu.memory_space<smem>>, %arg3: memref<2xi32, #tpu.memory_space<smem>>) -> (i32, i32) {
    %c0_i32 = arith.constant 0 : i32
    %c0_i32_0 = arith.constant 0 : i32
    return %arg0, %c0_i32 : i32, i32
  }
  func.func @transform_3(%arg0: i32, %arg1: i32, %arg2: memref<2xi32, #tpu.memory_space<smem>>, %arg3: memref<2xi32, #tpu.memory_space<smem>>) -> (i32, i32) {
    %c0_i32 = arith.constant 0 : i32
    %c0_i32_0 = arith.constant 0 : i32
    %c0_i32_1 = arith.constant 0 : i32
    return %c0_i32, %c0_i32_0 : i32, i32
  }
  func.func @transform_4(%arg0: i32, %arg1: i32, %arg2: memref<2xi32, #tpu.memory_space<smem>>, %arg3: memref<2xi32, #tpu.memory_space<smem>>) -> (i32, i32) {
    %c0_i32 = arith.constant 0 : i32
    %c0_i32_0 = arith.constant 0 : i32
    %c0_i32_1 = arith.constant 0 : i32
    return %c0_i32, %c0_i32_0 : i32, i32
  }
  func.func @transform_5(%arg0: i32, %arg1: i32, %arg2: memref<2xi32, #tpu.memory_space<smem>>, %arg3: memref<2xi32, #tpu.memory_space<smem>>) -> (i32, i32) {
    %c0_i32 = arith.constant 0 : i32
    %c0_i32_0 = arith.constant 0 : i32
    %c0_i32_1 = arith.constant 0 : i32
    return %c0_i32, %c0_i32_0 : i32, i32
  }
  func.func @transform_6(%arg0: i32, %arg1: i32, %arg2: memref<2xi32, #tpu.memory_space<smem>>, %arg3: memref<2xi32, #tpu.memory_space<smem>>) -> (i32, i32) {
    %c0_i32 = arith.constant 0 : i32
    %c0_i32_0 = arith.constant 0 : i32
    %c0_i32_1 = arith.constant 0 : i32
    return %c0_i32, %c0_i32_0 : i32, i32
  }
  func.func @transform_7(%arg0: i32, %arg1: i32, %arg2: memref<2xi32, #tpu.memory_space<smem>>, %arg3: memref<2xi32, #tpu.memory_space<smem>>) -> (i32, i32) {
    %c0_i32 = arith.constant 0 : i32
    %c0_i32_0 = arith.constant 0 : i32
    return %arg0, %c0_i32 : i32, i32
  }
}

</mosaic_0001>

<llo_original>
// kernel: tpu_custom_call.1
$region0: #{tpu_custom_call.1}
  #allocation0 [shape = 'u32[]', space=smem, size = 0x4, offset = 0x4, fixed_abs, tag = 'smem constant byte address 0x4 - core index']
  #allocation1 [shape = 'u32[144,128]{1,0:T(1,128)}', space=vmem, size = 0x12000, scoped, tag = 'internal scratch']
  #allocation2 [shape = 'f32[8,1]{1,0:T(8,128)}', space=vmem, size = 0x1000, scoped, tag = 'scratch operand']
  #allocation3 [shape = 'f32[8,1]{1,0:T(8,128)}', space=vmem, size = 0x1000, scoped, tag = 'scratch operand']
  #allocation4 [shape = 'f32[8,128]{1,0:T(8,128)}', space=vmem, size = 0x1000, scoped, tag = 'scratch operand']
  #allocation5 [shape = 'f32[8,128]{1,0:T(8,128)}', space=vmem, size = 0x1000, scoped, tag = 'scratch operand']
  #allocation6 [shape = 'f32[8,128]{1,0:T(8,128)}', space=vmem, size = 0x1000, scoped, tag = 'scratch operand']
  #allocation7 [shape = 's32[1]{0}', space=sflag, size = 0x4, scoped, tag = 'scoped memory for tpu_custom_call.1']
  #allocation8 [shape = 'u8[512]{0}', space=smem, size = 0x200, scoped, tag = 'prefetched SMEM operand 0']
  #allocation9 [shape = 'u8[512]{0}', space=smem, size = 0x200, scoped, tag = 'prefetched SMEM operand 1']
  #allocation10 [shape = 'bf16[1,1]{1,0:T(2,128)S(1)}', space=vmem, size = 0x200, scoped, tag = 'scoped memory for tpu_custom_call.1']
  #allocation11 [shape = 'f32[1,1]{1,0:T(1,128)S(1)}', space=vmem, size = 0x200, scoped, tag = 'scoped memory for tpu_custom_call.1']
  #allocation12 [shape = 'f32[1,1]{1,0:T(1,128)S(1)}', space=vmem, size = 0x200, scoped, tag = 'scoped memory for tpu_custom_call.1']
  #allocation17 [shape = 's32[]', space=sflag, size = 0x4, offset = 0, fixed_abs, tag = 'sflag constant byte address 0x0 - dummy sync flag']
  %s0 = inlined_call_operand.vmem [shape: s32[2], index: 0, kind: input, shape index: {}]
  %s1 = inlined_call_operand.vmem [shape: s32[2], index: 1, kind: input, shape index: {}]
  %s2 = inlined_call_operand.hbm [shape: bf16[16,32,128], index: 2, kind: input, shape index: {}]
  %s3 = inlined_call_operand.vmem [shape: s32[16,1], index: 3, kind: input, shape index: {}]
  %s4 = inlined_call_operand.vmem [shape: s32[16,1], index: 4, kind: input, shape index: {}]
  %s5 = inlined_call_operand.<no memory space> [shape: bf16[1,1], index: 5, kind: input, shape index: {}]
  %s6 = inlined_call_operand.<no memory space> [shape: f32[1,1], index: 6, kind: input, shape index: {}]
  %s7 = inlined_call_operand.vmem [shape: f32[1,128], index: 7, kind: input, shape index: {}]
  %s8 = inlined_call_operand.<no memory space> [shape: f32[1,1], index: 8, kind: input, shape index: {}]
  %s9 = inlined_call_operand.hbm [shape: f32[16,128], index: 9, kind: output, shape index: {}]
  %s10 = sld [smem:[#allocation0]]
  $region77: #{tpu_custom_call.1} parent=0
    _
  %s12 = ssub.s32 1, %s10
  %s13 = scalar_select 0, %s12, %s10
  %s14 = sshll.u32 %s0, 4
  %s15 = int_to_ptr.vmem [resolvable:$true] %s14
  %17 = dma.vmem_to_smem %s15, 16, [#allocation8], [#allocation7]
  %s18 = sshll.u32 %s1, 4
  %s19 = int_to_ptr.vmem [resolvable:$true] %s18
  %21 = dma.vmem_to_smem %s19, 16, [#allocation9], [#allocation7]
  %v22 = vstv %s5
  %23 = vst [vmem:[#allocation10] sm:$0x1] %v22
  %v24 = vstv %s6
  %25 = vst [vmem:[#allocation11] sm:$0x1] %v24
  %v26 = vstv %s8
  %27 = vst [vmem:[#allocation12] sm:$0x1] %v26
  %28 = dma.done [#allocation7], 32
  %29 = sfence
  $region1: #{tpu_custom_call.1} parent=0
    #allocation13 [shape = 'u8[65536]{0}', space=vmem, size = 0x10000, scoped, tag = 'input window, operand 2']
    #allocation14 [shape = 's32[2]{0}', space=sflag, size = 0x8, scoped, tag = 'scoped memory for tpu_custom_call.1']
    #allocation15 [shape = 's32[2]{0}', space=sflag, size = 0x8, scoped, tag = 'scoped memory for tpu_custom_call.1']
    #allocation16 [shape = 'u8[8192]{0}', space=vmem, size = 0x2000, scoped, tag = 'output window, operand 0']
    %30 = vsyncpa [#allocation14], 0
    %s31 = scalar_lea.sflag [#allocation14], 1
    %32 = vsyncpa %s31, 0
    %33 = vsyncpa [#allocation15], 0
    %s34 = scalar_lea.sflag [#allocation15], 1
    %35 = vsyncpa %s34, 0
    loop: start=0, step=1, limit=6
    $region2: #{tpu_custom_call.1} parent=1 // loop_pre_header
      _
    $region3: #{tpu_custom_call.1} parent=1 // loop_header
      %s37 = sphi 0, %s41
      %p38 = scmp.ge.s32.totalorder %s37, 6
      %s44 = sphi 0, %s56
      %s45 = sphi 0, %s52
      %s46 = sphi 0, %s44
      %s47 = sphi 0, %s45
      %s48 = sphi 0, %s46
      %s49 = sphi 0, %s47
      %s73 = sphi 0, %s75
      %s76 = sphi 0, %s73
      %s77 = sphi 0, %s76
      %s93 = sphi 0, %s77
      %s99 = sphi 0, %s101
      %s102 = sphi 0, %s99
      %s103 = sphi 0, %s102
      %s119 = sphi 0, %s103
      %s125 = sphi 0, %s127
      %s128 = sphi 0, %s125
      %s129 = sphi 0, %s128
      %s145 = sphi 0, %s129
      %s149 = sphi 0, %s149
      %s151 = sphi 0, %s149
      %s152 = sphi 0, %s151
      %s166 = sphi 0, %s152
      %s170 = sphi 0, %s170
      %s172 = sphi 0, %s170
      %s173 = sphi 0, %s172
      %s187 = sphi 0, %s173
      %s191 = sphi 0, %s191
      %s193 = sphi 0, %s191
      %s194 = sphi 0, %s193
      %s208 = sphi 0, %s194
      %s212 = sphi 0, %s212
      %s214 = sphi 0, %s212
      %s215 = sphi 0, %s214
      %s229 = sphi 0, %s215
      %s235 = sphi 0, %s237
      %s238 = sphi 0, %s235
      %s239 = sphi 0, %s238
      %s255 = sphi 0, %s239
    $region4: #{tpu_custom_call.1} parent=1 // loop_header_branch
      %40 = sbr.rel (%p38) target = $region8
    $region5: #{tpu_custom_call.1} parent=1 // loop_body
      %s42 = ssub.s32 %s37, 1
      %s43 = ssub.s32 %s37, 2
      %s50 = sadd.s32 1, %s45
      %p51 = scmp.ge.s32.totalorder %s50, 2
      %s52 = scalar_select %p51, 0, %s50
      %s53 = sadd.s32 1, %s44
      %s54 = scalar_select %p51, %s53, %s44
      %p55 = scmp.ge.s32.totalorder %s54, 2
      %s56 = scalar_select %p55, 0, %s54
      %s57 = sld [smem:[#allocation8 + %s44]]
      %s58 = sld [smem:[#allocation9 + %s44]]
      %s59 = ssub.s32 %s58, 1
      %p60 = scmp.lt.s32.totalorder %s45, %s59
      %s61 = scalar_select %p60, %s45, %s59
      %s62 = sadd.s32 %s57, %s61
      %s63 = sld [smem:[#allocation8 + %s56]]
      %s64 = sld [smem:[#allocation9 + %s56]]
      %s65 = ssub.s32 %s64, 1
      %p66 = scmp.lt.s32.totalorder %s52, %s65
      %s67 = scalar_select %p66, %s52, %s65
      %s68 = sadd.s32 %s63, %s67
      %s69 = ssub.s32 %s44, %s56
      %s70 = ssub.s32 %s62, %s68
      %s71 = sor.u32 %s69, %s70
      %p72 = scmp.eq.s32.totalorder %s71, 0
      %s74 = sadd.s32 %s73, 1
      %s75 = scalar_select %p72, %s73, %s74
      %p78 = pneg %p72
      %p79 = scmp.eq.s32.totalorder %s37, 3
      %p80 = por %p78, %p79
      %p81 = scmp.ne.s32.totalorder %s73, %s76
      %p82 = scmp.eq.s32.totalorder %s37, 0
      %p83 = por %p81, %p82
      %p84 = scmp.ne.s32.totalorder %s73, %s76
      %p85 = scmp.eq.s32.totalorder %s42, 3
      %p86 = por %p84, %p85
      %p87 = scmp.ne.s32.totalorder %s76, %s77
      %p88 = scmp.eq.s32.totalorder %s42, 0
      %p89 = por %p87, %p88
      %p90 = scmp.ne.s32.totalorder %s76, %s77
      %p91 = scmp.eq.s32.totalorder %s43, 3
      %p92 = por %p90, %p91
      %p94 = scmp.ne.s32.totalorder %s77, %s93
      %p95 = scmp.eq.s32.totalorder %s43, 0
      %p96 = por %p94, %p95
      %s97 = ssub.s32 %s44, %s56
      %p98 = scmp.eq.s32.totalorder %s97, 0
      %s100 = sadd.s32 %s99, 1
      %s101 = scalar_select %p98, %s99, %s100
      %p104 = pneg %p98
      %p105 = scmp.eq.s32.totalorder %s37, 3
      %p106 = por %p104, %p105
      %p107 = scmp.ne.s32.totalorder %s99, %s102
      %p108 = scmp.eq.s32.totalorder %s37, 0
      %p109 = por %p107, %p108
      %p110 = scmp.ne.s32.totalorder %s99, %s102
      %p111 = scmp.eq.s32.totalorder %s42, 3
      %p112 = por %p110, %p111
      %p113 = scmp.ne.s32.totalorder %s102, %s103
      %p114 = scmp.eq.s32.totalorder %s42, 0
      %p115 = por %p113, %p114
      %p116 = scmp.ne.s32.totalorder %s102, %s103
      %p117 = scmp.eq.s32.totalorder %s43, 3
      %p118 = por %p116, %p117
      %p120 = scmp.ne.s32.totalorder %s103, %s119
      %p121 = scmp.eq.s32.totalorder %s43, 0
      %p122 = por %p120, %p121
      %s123 = ssub.s32 %s44, %s56
      %p124 = scmp.eq.s32.totalorder %s123, 0
      %s126 = sadd.s32 %s125, 1
      %s127 = scalar_select %p124, %s125, %s126
      %p130 = pneg %p124
      %p131 = scmp.eq.s32.totalorder %s37, 3
      %p132 = por %p130, %p131
      %p133 = scmp.ne.s32.totalorder %s125, %s128
      %p134 = scmp.eq.s32.totalorder %s37, 0
      %p135 = por %p133, %p134
      %p136 = scmp.ne.s32.totalorder %s125, %s128
      %p137 = scmp.eq.s32.totalorder %s42, 3
      %p138 = por %p136, %p137
      %p139 = scmp.ne.s32.totalorder %s128, %s129
      %p140 = scmp.eq.s32.totalorder %s42, 0
      %p141 = por %p139, %p140
      %p142 = scmp.ne.s32.totalorder %s128, %s129
      %p143 = scmp.eq.s32.totalorder %s43, 3
      %p144 = por %p142, %p143
      %p146 = scmp.ne.s32.totalorder %s129, %s145
      %p147 = scmp.eq.s32.totalorder %s43, 0
      %p148 = por %p146, %p147
      %s150 = sadd.s32 %s149, 1
      %p153 = scmp.eq.s32.totalorder %s37, 3
      %p154 = scmp.ne.s32.totalorder %s149, %s151
      %p155 = scmp.eq.s32.totalorder %s37, 0
      %p156 = por %p154, %p155
      %p157 = scmp.ne.s32.totalorder %s149, %s151
      %p158 = scmp.eq.s32.totalorder %s42, 3
      %p159 = por %p157, %p158
      %p160 = scmp.ne.s32.totalorder %s151, %s152
      %p161 = scmp.eq.s32.totalorder %s42, 0
      %p162 = por %p160, %p161
      %p163 = scmp.ne.s32.totalorder %s151, %s152
      %p164 = scmp.eq.s32.totalorder %s43, 3
      %p165 = por %p163, %p164
      %p167 = scmp.ne.s32.totalorder %s152, %s166
      %p168 = scmp.eq.s32.totalorder %s43, 0
      %p169 = por %p167, %p168
      %s171 = sadd.s32 %s170, 1
      %p174 = scmp.eq.s32.totalorder %s37, 3
      %p175 = scmp.ne.s32.totalorder %s170, %s172
      %p176 = scmp.eq.s32.totalorder %s37, 0
      %p177 = por %p175, %p176
      %p178 = scmp.ne.s32.totalorder %s170, %s172
      %p179 = scmp.eq.s32.totalorder %s42, 3
      %p180 = por %p178, %p179
      %p181 = scmp.ne.s32.totalorder %s172, %s173
      %p182 = scmp.eq.s32.totalorder %s42, 0
      %p183 = por %p181, %p182
      %p184 = scmp.ne.s32.totalorder %s172, %s173
      %p185 = scmp.eq.s32.totalorder %s43, 3
      %p186 = por %p184, %p185
      %p188 = scmp.ne.s32.totalorder %s173, %s187
      %p189 = scmp.eq.s32.totalorder %s43, 0
      %p190 = por %p188, %p189
      %s192 = sadd.s32 %s191, 1
      %p195 = scmp.eq.s32.totalorder %s37, 3
      %p196 = scmp.ne.s32.totalorder %s191, %s193
      %p197 = scmp.eq.s32.totalorder %s37, 0
      %p198 = por %p196, %p197
      %p199 = scmp.ne.s32.totalorder %s191, %s193
      %p200 = scmp.eq.s32.totalorder %s42, 3
      %p201 = por %p199, %p200
      %p202 = scmp.ne.s32.totalorder %s193, %s194
      %p203 = scmp.eq.s32.totalorder %s42, 0
      %p204 = por %p202, %p203
      %p205 = scmp.ne.s32.totalorder %s193, %s194
      %p206 = scmp.eq.s32.totalorder %s43, 3
      %p207 = por %p205, %p206
      %p209 = scmp.ne.s32.totalorder %s194, %s208
      %p210 = scmp.eq.s32.totalorder %s43, 0
      %p211 = por %p209, %p210
      %s213 = sadd.s32 %s212, 1
      %p216 = scmp.eq.s32.totalorder %s37, 3
      %p217 = scmp.ne.s32.totalorder %s212, %s214
      %p218 = scmp.eq.s32.totalorder %s37, 0
      %p219 = por %p217, %p218
      %p220 = scmp.ne.s32.totalorder %s212, %s214
      %p221 = scmp.eq.s32.totalorder %s42, 3
      %p222 = por %p220, %p221
      %p223 = scmp.ne.s32.totalorder %s214, %s215
      %p224 = scmp.eq.s32.totalorder %s42, 0
      %p225 = por %p223, %p224
      %p226 = scmp.ne.s32.totalorder %s214, %s215
      %p227 = scmp.eq.s32.totalorder %s43, 3
      %p228 = por %p226, %p227
      %p230 = scmp.ne.s32.totalorder %s215, %s229
      %p231 = scmp.eq.s32.totalorder %s43, 0
      %p232 = por %p230, %p231
      %s233 = ssub.s32 %s44, %s56
      %p234 = scmp.eq.s32.totalorder %s233, 0
      %s236 = sadd.s32 %s235, 1
      %s237 = scalar_select %p234, %s235, %s236
      %p240 = pneg %p234
      %p241 = scmp.eq.s32.totalorder %s37, 3
      %p242 = por %p240, %p241
      %p243 = scmp.ne.s32.totalorder %s235, %s238
      %p244 = scmp.eq.s32.totalorder %s37, 0
      %p245 = por %p243, %p244
      %p246 = scmp.ne.s32.totalorder %s235, %s238
      %p247 = scmp.eq.s32.totalorder %s42, 3
      %p248 = por %p246, %p247
      %p249 = scmp.ne.s32.totalorder %s238, %s239
      %p250 = scmp.eq.s32.totalorder %s42, 0
      %p251 = por %p249, %p250
      %p252 = scmp.ne.s32.totalorder %s238, %s239
      %p253 = scmp.eq.s32.totalorder %s43, 3
      %p254 = por %p252, %p253
      %p256 = scmp.ne.s32.totalorder %s239, %s255
      %p257 = scmp.eq.s32.totalorder %s43, 0
      %p258 = por %p256, %p257
      %p259 = scmp.le.s32.totalorder 1, %s37
      %p260 = scmp.lt.s32.totalorder %s37, 5
      %p261 = pnand %p259, %p260
      %p262 = pneg %p261
      // Predicated region
      $region9: #{tpu_custom_call.1} parent=5 // pred_check
        _
      $region10: #{tpu_custom_call.1} parent=5 // pred_check_branch
        %264 = sbr.rel (%p261) target = $region12
      $region11: #{tpu_custom_call.1} parent=5 // pred_region
        %s265 = ssub.s32 %s37, 1
        // Predicated region
        $region13: #{tpu_custom_call.1} parent=11 // pred_check
          %p266 = pneg %p162
        $region14: #{tpu_custom_call.1} parent=11 // pred_check_branch
          %268 = sbr.rel (%p266) target = $region16
        $region15: #{tpu_custom_call.1} parent=11 // pred_region
          _
        $region16: #{tpu_custom_call.1} parent=11 // pred_fallthru
          _
        // Predicated region
        $region17: #{tpu_custom_call.1} parent=11 // pred_check
          %p269 = pneg %p183
        $region18: #{tpu_custom_call.1} parent=11 // pred_check_branch
          %271 = sbr.rel (%p269) target = $region20
        $region19: #{tpu_custom_call.1} parent=11 // pred_region
          _
        $region20: #{tpu_custom_call.1} parent=11 // pred_fallthru
          _
        // Predicated region
        $region21: #{tpu_custom_call.1} parent=11 // pred_check
          %p272 = pneg %p204
        $region22: #{tpu_custom_call.1} parent=11 // pred_check_branch
          %274 = sbr.rel (%p272) target = $region24
        $region23: #{tpu_custom_call.1} parent=11 // pred_region
          _
        $region24: #{tpu_custom_call.1} parent=11 // pred_fallthru
          _
        // Predicated region
        $region25: #{tpu_custom_call.1} parent=11 // pred_check
          %p275 = pneg %p225
        $region26: #{tpu_custom_call.1} parent=11 // pred_check_branch
          %277 = sbr.rel (%p275) target = $region28
        $region27: #{tpu_custom_call.1} parent=11 // pred_region
          _
        $region28: #{tpu_custom_call.1} parent=11 // pred_fallthru
          _
      $region12: #{tpu_custom_call.1} parent=5 // pred_fallthru
        _
      %p278 = scmp.lt.s32.totalorder %s37, 4
      // Predicated region
      $region29: #{tpu_custom_call.1} parent=5 // pred_check
        %p279 = pneg %p278
      $region30: #{tpu_custom_call.1} parent=5 // pred_check_branch
        %281 = sbr.rel (%p279) target = $region32
      $region31: #{tpu_custom_call.1} parent=5 // pred_region
        // Predicated region
        $region33: #{tpu_custom_call.1} parent=31 // pred_check
          %p282 = pneg %p83
        $region34: #{tpu_custom_call.1} parent=31 // pred_check_branch
          %284 = sbr.rel (%p282) target = $region36
        $region35: #{tpu_custom_call.1} parent=31 // pred_region
          #allocation18 [shape = 'u32[6]{0}', space=smem, size = 0x18, scoped, tag = 'DMA stride descriptor']
          %s285 = sand.u32 %s73, 1
          %s286 = scalar_lea.sflag [#allocation14], %s285
          %s287 = sand.u32 %s73, 1
          %s288 = smul.addr %s287, 64
          %s289 = scalar_lea.vmem [#allocation13], %s288
          %s290 = sld [smem:[#allocation8 + %s44]]
          %s291 = sld [smem:[#allocation9 + %s44]]
          %s292 = ssub.s32 %s291, 1
          %p293 = scmp.lt.s32.totalorder %s45, %s292
          %s294 = scalar_select %p293, %s45, %s292
          %s295 = sadd.s32 %s290, %s294
          %s296 = smul.u32 8, %s44
          %s297 = smul.u32 2, %s295
          %s299 = ssub.s32 1024, 1024
          %300 = vsyncadd %s286, %s299
          %s301 = smul.addr %s296, 4
          %s302 = sadd.s32 %s297, %s301
          %s303 = smul.addr %s302, 64
          %s304 = scalar_lea.hbm %s2, %s303
          %s306 = sshll.u32 1, 14
          %s307 = sxor.u32 4294967295, %s306
          %s309 = sld [smem:[#allocation0]]
          %s310 = sadd.s32 2, %s309
          %s312 = sshll.u32 7, 26
          %s313 = sxor.u32 4294967295, %s312
          %s314 = sand.u32 0, %s313
          %s315 = sshll.u32 %s310, 26
          %s316 = sor.u32 %s314, %s315
          %s317 = sshll.u32 %s289, 4
          %s318 = int_to_ptr.vmem [resolvable:$true] %s317
          %324 = sst [smem:[#allocation18]] 256
          %s325 = scalar_lea.smem [#allocation18], 1
          %326 = sst [smem:[%s325]] 128
          %s327 = scalar_lea.smem [#allocation18], 2
          %328 = sst [smem:[%s327]] 2
          %s329 = scalar_lea.smem [#allocation18], 3
          %330 = sst [smem:[%s329]] 64
          %s331 = scalar_lea.smem [#allocation18], 4
          %332 = sst [smem:[%s331]] 64
          %s333 = scalar_lea.smem [#allocation18], 5
          %334 = sst [smem:[%s333]] 4
          %336 = dma.general %s304, 1024, %s318, %s286, [#allocation17], [#allocation18], %s316, 0
        $region36: #{tpu_custom_call.1} parent=31 // pred_fallthru
          _
        // Predicated region
        $region37: #{tpu_custom_call.1} parent=31 // pred_check
          %p337 = pneg %p109
        $region38: #{tpu_custom_call.1} parent=31 // pred_check_branch
          %339 = sbr.rel (%p337) target = $region40
        $region39: #{tpu_custom_call.1} parent=31 // pred_region
          %p340 = scmp.lt.s32.totalorder %s44, 1
          %s341 = scalar_select %p340, %s44, 1
          %s342 = smul.addr %s341, 8
          %s343 = scalar_lea.vmem %s3, %s342
        $region40: #{tpu_custom_call.1} parent=31 // pred_fallthru
          _
        // Predicated region
        $region41: #{tpu_custom_call.1} parent=31 // pred_check
          %p344 = pneg %p135
        $region42: #{tpu_custom_call.1} parent=31 // pred_check_branch
          %346 = sbr.rel (%p344) target = $region44
        $region43: #{tpu_custom_call.1} parent=31 // pred_region
          %p347 = scmp.lt.s32.totalorder %s44, 1
          %s348 = scalar_select %p347, %s44, 1
          %s349 = smul.addr %s348, 8
          %s350 = scalar_lea.vmem %s4, %s349
        $region44: #{tpu_custom_call.1} parent=31 // pred_fallthru
          _
      $region32: #{tpu_custom_call.1} parent=5 // pred_fallthru
        _
      %p351 = scmp.le.s32.totalorder 1, %s37
      %p352 = scmp.lt.s32.totalorder %s37, 5
      %p353 = pnand %p351, %p352
      %p354 = pneg %p353
      // Predicated region
      $region45: #{tpu_custom_call.1} parent=5 // pred_check
        _
      $region46: #{tpu_custom_call.1} parent=5 // pred_check_branch
        %356 = sbr.rel (%p353) target = $region48
      $region47: #{tpu_custom_call.1} parent=5 // pred_region
        %s357 = ssub.s32 %s37, 1
        %s358 = sand.u32 %s76, 1
        %s359 = scalar_lea.sflag [#allocation14], %s358
        %s360 = sand.u32 %s76, 1
        %s361 = smul.addr %s360, 64
        %s362 = scalar_lea.vmem [#allocation13], %s361
        // Predicated region
        $region49: #{tpu_custom_call.1} parent=47 // pred_check
          %p363 = pneg %p89
        $region50: #{tpu_custom_call.1} parent=47 // pred_check_branch
          %365 = sbr.rel (%p363) target = $region52
        $region51: #{tpu_custom_call.1} parent=47 // pred_region
          %366 = dma.done %s359, 1024
        $region52: #{tpu_custom_call.1} parent=47 // pred_fallthru
          _
        %s367 = sand.u32 %s76, 1
        %s368 = scalar_lea.sflag [#allocation14], %s367
        %s369 = sand.u32 %s76, 1
        %s370 = smul.addr %s369, 64
        %s371 = scalar_lea.vmem [#allocation13], %s370
        %p372 = pneg %p89
        %p373 = pneg %p86
        %p374 = scmp.lt.s32.totalorder %s46, 1
        %s375 = scalar_select %p374, %s46, 1
        %s376 = smul.addr %s375, 8
        %s377 = scalar_lea.vmem %s3, %s376
        %p378 = pneg %p115
        %p379 = pneg %p112
        %p380 = scmp.lt.s32.totalorder %s46, 1
        %s381 = scalar_select %p380, %s46, 1
        %s382 = smul.addr %s381, 8
        %s383 = scalar_lea.vmem %s4, %s382
        %p384 = pneg %p141
        %p385 = pneg %p138
        %p386 = pneg %p162
        %p387 = pneg %p159
        %p388 = pneg %p183
        %p389 = pneg %p180
        %p390 = pneg %p204
        %p391 = pneg %p201
        %p392 = pneg %p225
        %p393 = pneg %p222
        %p394 = pneg %p251
        %p395 = pneg %p248
        %s396 = sand.u32 %s238, 1
        %s397 = scalar_lea.sflag [#allocation15], %s396
        %s398 = sand.u32 %s238, 1
        %s399 = smul.addr %s398, 8
        %s400 = scalar_lea.vmem [#allocation16], %s399
        %s401 = sld [smem:[#allocation8 + %s46]]
        %s402 = sld [smem:[#allocation9 + %s46]]
        %s403 = ssub.s32 %s402, 1
        %p404 = scmp.lt.s32.totalorder %s47, %s403
        %s405 = scalar_select %p404, %s47, %s403
        %s406 = sadd.s32 %s401, %s405
        %s407 = smul.u32 8, %s46
        %s408 = smul.u32 2, %s406
        %p409 = scmp.lt.s32.totalorder %s46, 1
        %s410 = scalar_select %p409, %s46, 1
        %s411 = smul.addr %s410, 8
        %s412 = scalar_lea.vmem %s3, %s411
        %p413 = scmp.lt.s32.totalorder %s46, 1
        %s414 = scalar_select %p413, %s46, 1
        %s415 = smul.addr %s414, 8
        %s416 = scalar_lea.vmem %s4, %s415
        %s417 = sld [smem:[#allocation9 + %s46]]
        %s418 = sld [smem:[#allocation8 + %s46]]
        %s419 = ssub.s32 %s417, 1
        %p420 = scmp.lt.s32.totalorder %s47, %s419
        %s421 = scalar_select %p420, %s47, %s419
        %s422 = sadd.s32 %s418, %s421
        %p423 = scmp.eq.s32.totalorder %s47, 0
        // Predicated region
        $region53: #{tpu_custom_call.1} parent=47 // pred_check
          %p424 = pneg %p423
        $region54: #{tpu_custom_call.1} parent=47 // pred_check_branch
          %426 = sbr.rel (%p424) target = $region56
        $region55: #{tpu_custom_call.1} parent=47 // pred_region
          %vm427 = vcmask 7168
          %428 = vst.msk [vmem:[#allocation2] sm:$0xff] %vm427, -1e+30
          %429 = vst.msk [vmem:[#allocation3] sm:$0xff] %vm427, 0.0
          %430 = vst [vmem:[#allocation4] sm:$0xff] 0.0
        $region56: #{tpu_custom_call.1} parent=47 // pred_fallthru
          _
        %p431 = scmp.lt.s32.totalorder %s47, %s417
        // Predicated region
        $region57: #{tpu_custom_call.1} parent=47 // pred_check
          %p432 = pneg %p431
        $region58: #{tpu_custom_call.1} parent=47 // pred_check_branch
          %434 = sbr.rel (%p432) target = $region60
        $region59: #{tpu_custom_call.1} parent=47 // pred_region
          %v435 = vld [vmem:[%s362] sm:$0xf]
          %v436 = vld [vmem:[%s362 + $0x4] sm:$0xf]
          %v437 = vld [vmem:[%s362 + $0x8] sm:$0xf]
          %v438 = vld [vmem:[%s362 + $0xc] sm:$0xf]
          %v439 = vld [vmem:[%s362 + $0x10] sm:$0xf]
          %v440 = vld [vmem:[%s362 + $0x14] sm:$0xf]
          %v441 = vld [vmem:[%s362 + $0x18] sm:$0xf]
          %v442 = vld [vmem:[%s362 + $0x1c] sm:$0xf]
          %v443 = vld [vmem:[%s362 + $0x20] sm:$0xf]
          %v444 = vld [vmem:[%s362 + $0x24] sm:$0xf]
          %v445 = vld [vmem:[%s362 + $0x28] sm:$0xf]
          %v446 = vld [vmem:[%s362 + $0x2c] sm:$0xf]
          %v447 = vld [vmem:[%s362 + $0x30] sm:$0xf]
          %v448 = vld [vmem:[%s362 + $0x34] sm:$0xf]
          %v449 = vld [vmem:[%s362 + $0x38] sm:$0xf]
          %v450 = vld [vmem:[%s362 + $0x3c] sm:$0xf]
          %v451 = vld [vmem:[%s7] sm:$0x1]
          %v452 = vunpack.c.l.bf16 %v435
          %v453 = vunpack.c.l.bf16 %v436
          %v454 = vunpack.c.l.bf16 %v437
          %v455 = vunpack.c.l.bf16 %v438
          %v456 = vunpack.c.l.bf16 %v439
          %v457 = vunpack.c.l.bf16 %v440
          %v458 = vunpack.c.l.bf16 %v441
          %v459 = vunpack.c.l.bf16 %v442
          %v460 = vunpack.c.l.bf16 %v443
          %v461 = vunpack.c.l.bf16 %v444
          %v462 = vunpack.c.l.bf16 %v445
          %v463 = vunpack.c.l.bf16 %v446
          %v464 = vunpack.c.l.bf16 %v447
          %v465 = vunpack.c.l.bf16 %v448
          %v466 = vunpack.c.l.bf16 %v449
          %v467 = vunpack.c.l.bf16 %v450
          %v469 = vlaneseq
          %v470 = vshrl.u32 %v469, 7
          %v471 = vsub.s32 0, %v470
          %v472 = vrot.slane %v451, %v471
          %v474 = vmul.f32 %v452, %v472
          %v475 = vmul.f32 %v453, %v472
          %v476 = vmul.f32 %v454, %v472
          %v477 = vmul.f32 %v455, %v472
          %v478 = vmul.f32 %v456, %v472
          %v479 = vmul.f32 %v457, %v472
          %v480 = vmul.f32 %v458, %v472
          %v481 = vmul.f32 %v459, %v472
          %v482 = vmul.f32 %v460, %v472
          %v483 = vmul.f32 %v461, %v472
          %v484 = vmul.f32 %v462, %v472
          %v485 = vmul.f32 %v463, %v472
          %v486 = vmul.f32 %v464, %v472
          %v487 = vmul.f32 %v465, %v472
          %v488 = vmul.f32 %v466, %v472
          %v489 = vmul.f32 %v467, %v472
          %490 = vadd.xlane.f32.xlu0 %v474
          %v491 = vpop.xlane.xlu0 %490
          %492 = vadd.xlane.f32.xlu0 %v475
          %v493 = vpop.xlane.xlu0 %492
          %494 = vadd.xlane.f32.xlu0 %v476
          %v495 = vpop.xlane.xlu0 %494
          %496 = vadd.xlane.f32.xlu0 %v477
          %v497 = vpop.xlane.xlu0 %496
          %498 = vadd.xlane.f32.xlu0 %v478
          %v499 = vpop.xlane.xlu0 %498
          %500 = vadd.xlane.f32.xlu0 %v479
          %v501 = vpop.xlane.xlu0 %500
          %502 = vadd.xlane.f32.xlu0 %v480
          %v503 = vpop.xlane.xlu0 %502
          %504 = vadd.xlane.f32.xlu0 %v481
          %v505 = vpop.xlane.xlu0 %504
          %506 = vadd.xlane.f32.xlu0 %v482
          %v507 = vpop.xlane.xlu0 %506
          %508 = vadd.xlane.f32.xlu0 %v483
          %v509 = vpop.xlane.xlu0 %508
          %510 = vadd.xlane.f32.xlu0 %v484
          %v511 = vpop.xlane.xlu0 %510
          %512 = vadd.xlane.f32.xlu0 %v485
          %v513 = vpop.xlane.xlu0 %512
          %514 = vadd.xlane.f32.xlu0 %v486
          %v515 = vpop.xlane.xlu0 %514
          %516 = vadd.xlane.f32.xlu0 %v487
          %v517 = vpop.xlane.xlu0 %516
          %518 = vadd.xlane.f32.xlu0 %v488
          %v519 = vpop.xlane.xlu0 %518
          %520 = vadd.xlane.f32.xlu0 %v489
          %v521 = vpop.xlane.xlu0 %520
          %v522 = vld [vmem:[#allocation12] sm:$0x1]
          %v524 = vlaneseq
          %v525 = vshrl.u32 %v524, 7
          %v526 = vsub.s32 0, %v525
          %v527 = vrot.slane %v522, %v526
          %528 = vset.pattern.permute.xlu0 0
          %529 = vperm.xlu0 %528, %v527
          %v530 = vpop.permute.xlu0 %529
          %v532 = vadd.f32 %v491, %v530
          %v533 = vadd.f32 %v493, %v530
          %v534 = vadd.f32 %v495, %v530
          %v535 = vadd.f32 %v497, %v530
          %v536 = vadd.f32 %v499, %v530
          %v537 = vadd.f32 %v501, %v530
          %v538 = vadd.f32 %v503, %v530
          %v539 = vadd.f32 %v505, %v530
          %v540 = vadd.f32 %v507, %v530
          %v541 = vadd.f32 %v509, %v530
          %v542 = vadd.f32 %v511, %v530
          %v543 = vadd.f32 %v513, %v530
          %v544 = vadd.f32 %v515, %v530
          %v545 = vadd.f32 %v517, %v530
          %v546 = vadd.f32 %v519, %v530
          %v547 = vadd.f32 %v521, %v530
          %v548 = vld [vmem:[%s412] sm:$0xff]
          %v549 = vld [vmem:[%s416] sm:$0xff]
          %s550 = smul.u32 %s422, 16
          %v551 = vlaneseq
          %v552 = vand.u32 %v551, 127
          %v553 = vstv %s550
          %v554 = vadd.s32 %v553, %v552
          %555 = vset.pattern.permute.xlu0 0
          %556 = vperm.xlu0 %555, %v548
          %v557 = vpop.permute.xlu0 %556
          %vm558 = vcmp.ge.s32.totalorder %v554, %v557
          %559 = vset.pattern.permute.xlu0 0
          %560 = vperm.xlu0 %559, %v549
          %v561 = vpop.permute.xlu0 %560
          %vm562 = vcmp.le.s32.totalorder %v554, %v561
          %vm563 = vmand %vm558, %vm562
          %v580 = vlaneseq
          %v581 = vshrl.u32 %v580, 7
          %v582 = vsub.s32 %v552, %v581
          %v583 = vrot.slane %v532, %v582
          %v584 = vadd.s32 %v552, 4294967288
          %v585 = vlaneseq
          %v586 = vshrl.u32 %v585, 7
          %v587 = vsub.s32 %v584, %v586
          %v588 = vrot.slane %v533, %v587
          %vm589 = vcmask 130112
          %v590 = vsel %vm589, %v588, %v583
          %v591 = vlaneseq
          %v592 = vshrl.u32 %v591, 7
          %v593 = vsub.s32 %v552, %v592
          %v594 = vrot.slane %v534, %v593
          %v595 = vlaneseq
          %v596 = vshrl.u32 %v595, 7
          %v597 = vsub.s32 %v584, %v596
          %v598 = vrot.slane %v535, %v597
          %v599 = vsel %vm589, %v598, %v594
          %v600 = vlaneseq
          %v601 = vshrl.u32 %v600, 7
          %v602 = vsub.s32 %v552, %v601
          %v603 = vrot.slane %v536, %v602
          %v604 = vlaneseq
          %v605 = vshrl.u32 %v604, 7
          %v606 = vsub.s32 %v584, %v605
          %v607 = vrot.slane %v537, %v606
          %v608 = vsel %vm589, %v607, %v603
          %v609 = vlaneseq
          %v610 = vshrl.u32 %v609, 7
          %v611 = vsub.s32 %v552, %v610
          %v612 = vrot.slane %v538, %v611
          %v613 = vlaneseq
          %v614 = vshrl.u32 %v613, 7
          %v615 = vsub.s32 %v584, %v614
          %v616 = vrot.slane %v539, %v615
          %v617 = vsel %vm589, %v616, %v612
          %v618 = vlaneseq
          %v619 = vshrl.u32 %v618, 7
          %v620 = vsub.s32 %v552, %v619
          %v621 = vrot.slane %v540, %v620
          %v622 = vlaneseq
          %v623 = vshrl.u32 %v622, 7
          %v624 = vsub.s32 %v584, %v623
          %v625 = vrot.slane %v541, %v624
          %v626 = vsel %vm589, %v625, %v621
          %v627 = vlaneseq
          %v628 = vshrl.u32 %v627, 7
          %v629 = vsub.s32 %v552, %v628
          %v630 = vrot.slane %v542, %v629
          %v631 = vlaneseq
          %v632 = vshrl.u32 %v631, 7
          %v633 = vsub.s32 %v584, %v632
          %v634 = vrot.slane %v543, %v633
          %v635 = vsel %vm589, %v634, %v630
          %v636 = vlaneseq
          %v637 = vshrl.u32 %v636, 7
          %v638 = vsub.s32 %v552, %v637
          %v639 = vrot.slane %v544, %v638
          %v640 = vlaneseq
          %v641 = vshrl.u32 %v640, 7
          %v642 = vsub.s32 %v584, %v641
          %v643 = vrot.slane %v545, %v642
          %v644 = vsel %vm589, %v643, %v639
          %v645 = vlaneseq
          %v646 = vshrl.u32 %v645, 7
          %v647 = vsub.s32 %v552, %v646
          %v648 = vrot.slane %v546, %v647
          %v649 = vlaneseq
          %v650 = vshrl.u32 %v649, 7
          %v651 = vsub.s32 %v584, %v650
          %v652 = vrot.slane %v547, %v651
          %v653 = vsel %vm589, %v652, %v648
          %vm654 = vcmask 1041409
          %v655 = vsel %vm654, %v599, %v590
          %vm656 = vcmask 1042434
          %v657 = vsel %vm656, %v608, %v655
          %vm658 = vcmask 1043459
          %v659 = vsel %vm658, %v617, %v657
          %vm660 = vcmask 1044484
          %v661 = vsel %vm660, %v626, %v659
          %vm662 = vcmask 1045509
          %v663 = vsel %vm662, %v635, %v661
          %vm664 = vcmask 1046534
          %v665 = vsel %vm664, %v644, %v663
          %vm666 = vcmask 1047559
          %v667 = vsel %vm666, %v653, %v665
          %v669 = vsel %vm563, %v667, -1e+10
          %v670 = vld [vmem:[#allocation2] sm:$0xff]
          %vm671 = vcmask 130048
          %v672 = vsel %vm671, %v669, -inf
          %673 = vmax.xlane.f32.xlu0 %v672
          %v674 = vpop.xlane.xlu0 %673
          %v675 = vmax.f32 %v670, %v674
          %v676 = vsub.f32 %v670, %v675
          %v677 = vmul.f32 %v676, 1.442695
          %v678 = vpow.pop %v677
          %680 = vset.pattern.permute.xlu0 0
          %681 = vperm.xlu0 %680, %v675
          %v682 = vpop.permute.xlu0 %681
          %v684 = vsub.f32 %v669, %v682
          %v685 = vmul.f32 %v684, 1.442695
          %v686 = vpow.pop %v685
          %v687 = vld [vmem:[#allocation3] sm:$0xff]
          %v688 = vmul.f32 %v678, %v687
          %v689 = vsel %vm671, %v686, 0.0
          %690 = vadd.xlane.f32.xlu0 %v689
          %v691 = vpop.xlane.xlu0 %690
          %v692 = vadd.f32 %v688, %v691
          %vm693 = vcmask 7168
          %694 = vst.msk [vmem:[#allocation3] sm:$0xff] %vm693, %v692
          %v695 = vld [vmem:[#allocation4] sm:$0xff]
          %697 = vset.pattern.permute.xlu0 0
          %698 = vperm.xlu0 %697, %v678
          %v699 = vpop.permute.xlu0 %698
          %v701 = vmul.f32 %v699, %v695
          %v702 = vlaneseq
          %v703 = vshrl.u32 %v702, 7
          %v704 = vsub.s32 0, %v703
          %v705 = vrot.slane %v686, %v704
          %707 = vbcast.lane.b32.xlu0 %v705, 256
          %v708 = vpop.permute.xlu0 %707
          %s710 = sor.u32 256, 8
          %711 = vbcast.lane.b32.xlu0 %v705, %s710
          %v712 = vpop.permute.xlu0 %711
          %v713 = vlaneseq
          %v714 = vshrl.u32 %v713, 7
          %v715 = vsub.s32 1, %v714
          %v716 = vrot.slane %v686, %v715
          %718 = vbcast.lane.b32.xlu0 %v716, 256
          %v719 = vpop.permute.xlu0 %718
          %s721 = sor.u32 256, 8
          %722 = vbcast.lane.b32.xlu0 %v716, %s721
          %v723 = vpop.permute.xlu0 %722
          %v724 = vlaneseq
          %v725 = vshrl.u32 %v724, 7
          %v726 = vsub.s32 2, %v725
          %v727 = vrot.slane %v686, %v726
          %729 = vbcast.lane.b32.xlu0 %v727, 256
          %v730 = vpop.permute.xlu0 %729
          %s732 = sor.u32 256, 8
          %733 = vbcast.lane.b32.xlu0 %v727, %s732
          %v734 = vpop.permute.xlu0 %733
          %v735 = vlaneseq
          %v736 = vshrl.u32 %v735, 7
          %v737 = vsub.s32 3, %v736
          %v738 = vrot.slane %v686, %v737
          %740 = vbcast.lane.b32.xlu0 %v738, 256
          %v741 = vpop.permute.xlu0 %740
          %s743 = sor.u32 256, 8
          %744 = vbcast.lane.b32.xlu0 %v738, %s743
          %v745 = vpop.permute.xlu0 %744
          %v746 = vlaneseq
          %v747 = vshrl.u32 %v746, 7
          %v748 = vsub.s32 4, %v747
          %v749 = vrot.slane %v686, %v748
          %751 = vbcast.lane.b32.xlu0 %v749, 256
          %v752 = vpop.permute.xlu0 %751
          %s754 = sor.u32 256, 8
          %755 = vbcast.lane.b32.xlu0 %v749, %s754
          %v756 = vpop.permute.xlu0 %755
          %v757 = vlaneseq
          %v758 = vshrl.u32 %v757, 7
          %v759 = vsub.s32 5, %v758
          %v760 = vrot.slane %v686, %v759
          %762 = vbcast.lane.b32.xlu0 %v760, 256
          %v763 = vpop.permute.xlu0 %762
          %s765 = sor.u32 256, 8
          %766 = vbcast.lane.b32.xlu0 %v760, %s765
          %v767 = vpop.permute.xlu0 %766
          %v768 = vlaneseq
          %v769 = vshrl.u32 %v768, 7
          %v770 = vsub.s32 6, %v769
          %v771 = vrot.slane %v686, %v770
          %773 = vbcast.lane.b32.xlu0 %v771, 256
          %v774 = vpop.permute.xlu0 %773
          %s776 = sor.u32 256, 8
          %777 = vbcast.lane.b32.xlu0 %v771, %s776
          %v778 = vpop.permute.xlu0 %777
          %v779 = vlaneseq
          %v780 = vshrl.u32 %v779, 7
          %v781 = vsub.s32 7, %v780
          %v782 = vrot.slane %v686, %v781
          %784 = vbcast.lane.b32.xlu0 %v782, 256
          %v785 = vpop.permute.xlu0 %784
          %s787 = sor.u32 256, 8
          %788 = vbcast.lane.b32.xlu0 %v782, %s787
          %v789 = vpop.permute.xlu0 %788
          %v790 = vmul.f32 %v708, %v452
          %v791 = vmul.f32 %v712, %v453
          %v792 = vmul.f32 %v719, %v454
          %v793 = vmul.f32 %v723, %v455
          %v794 = vmul.f32 %v730, %v456
          %v795 = vmul.f32 %v734, %v457
          %v796 = vmul.f32 %v741, %v458
          %v797 = vmul.f32 %v745, %v459
          %v798 = vmul.f32 %v752, %v460
          %v799 = vmul.f32 %v756, %v461
          %v800 = vmul.f32 %v763, %v462
          %v801 = vmul.f32 %v767, %v463
          %v802 = vmul.f32 %v774, %v464
          %v803 = vmul.f32 %v778, %v465
          %v804 = vmul.f32 %v785, %v466
          %v805 = vmul.f32 %v789, %v467
          %v806 = vadd.f32 %v790, %v791
          %v807 = vrot.slane %v806, 4
          %v808 = vadd.f32 %v806, %v807
          %v809 = vrot.slane %v808, 2
          %v810 = vadd.f32 %v808, %v809
          %v811 = vrot.slane %v810, 1
          %v812 = vadd.f32 %v810, %v811
          %v813 = vadd.f32 %v792, %v793
          %v814 = vrot.slane %v813, 4
          %v815 = vadd.f32 %v813, %v814
          %v816 = vrot.slane %v815, 2
          %v817 = vadd.f32 %v815, %v816
          %v818 = vrot.slane %v817, 1
          %v819 = vadd.f32 %v817, %v818
          %v820 = vadd.f32 %v794, %v795
          %v821 = vrot.slane %v820, 4
          %v822 = vadd.f32 %v820, %v821
          %v823 = vrot.slane %v822, 2
          %v824 = vadd.f32 %v822, %v823
          %v825 = vrot.slane %v824, 1
          %v826 = vadd.f32 %v824, %v825
          %v827 = vadd.f32 %v796, %v797
          %v828 = vrot.slane %v827, 4
          %v829 = vadd.f32 %v827, %v828
          %v830 = vrot.slane %v829, 2
          %v831 = vadd.f32 %v829, %v830
          %v832 = vrot.slane %v831, 1
          %v833 = vadd.f32 %v831, %v832
          %v834 = vadd.f32 %v798, %v799
          %v835 = vrot.slane %v834, 4
          %v836 = vadd.f32 %v834, %v835
          %v837 = vrot.slane %v836, 2
          %v838 = vadd.f32 %v836, %v837
          %v839 = vrot.slane %v838, 1
          %v840 = vadd.f32 %v838, %v839
          %v841 = vadd.f32 %v800, %v801
          %v842 = vrot.slane %v841, 4
          %v843 = vadd.f32 %v841, %v842
          %v844 = vrot.slane %v843, 2
          %v845 = vadd.f32 %v843, %v844
          %v846 = vrot.slane %v845, 1
          %v847 = vadd.f32 %v845, %v846
          %v848 = vadd.f32 %v802, %v803
          %v849 = vrot.slane %v848, 4
          %v850 = vadd.f32 %v848, %v849
          %v851 = vrot.slane %v850, 2
          %v852 = vadd.f32 %v850, %v851
          %v853 = vrot.slane %v852, 1
          %v854 = vadd.f32 %v852, %v853
          %v855 = vadd.f32 %v804, %v805
          %v856 = vrot.slane %v855, 4
          %v857 = vadd.f32 %v855, %v856
          %v858 = vrot.slane %v857, 2
          %v859 = vadd.f32 %v857, %v858
          %v860 = vrot.slane %v859, 1
          %v861 = vadd.f32 %v859, %v860
          %v870 = vsel %vm654, %v819, %v812
          %v871 = vsel %vm656, %v826, %v870
          %v872 = vsel %vm658, %v833, %v871
          %v873 = vsel %vm660, %v840, %v872
          %v874 = vsel %vm662, %v847, %v873
          %v875 = vsel %vm664, %v854, %v874
          %v876 = vsel %vm666, %v861, %v875
          %v878 = vadd.f32 %v701, %v876
          %879 = vst [vmem:[#allocation4] sm:$0xff] %v878
          %880 = vst.msk [vmem:[#allocation2] sm:$0xff] %vm693, %v675
        $region60: #{tpu_custom_call.1} parent=47 // pred_fallthru
          _
        %p881 = scmp.eq.s32.totalorder %s47, 1
        // Predicated region
        $region61: #{tpu_custom_call.1} parent=47 // pred_check
          %p882 = pneg %p881
        $region62: #{tpu_custom_call.1} parent=47 // pred_check_branch
          %884 = sbr.rel (%p882) target = $region64
        $region63: #{tpu_custom_call.1} parent=47 // pred_region
          %v885 = vld [vmem:[#allocation3] sm:$0xff]
          %v886 = vrcp.pop %v885
          %v887 = vmul.f32 %v885, %v886
          %v888 = vsub.f32 2.0, %v887
          %v889 = vmul.f32 %v886, %v888
          %v890 = vld [vmem:[#allocation4] sm:$0xff]
          %892 = vset.pattern.permute.xlu0 0
          %893 = vperm.xlu0 %892, %v889
          %v894 = vpop.permute.xlu0 %893
          %v896 = vmul.f32 %v890, %v894
          %897 = vst [vmem:[%s400] sm:$0xff] %v896
        $region64: #{tpu_custom_call.1} parent=47 // pred_fallthru
          _
        %s898 = sand.u32 %s238, 1
        %s899 = scalar_lea.sflag [#allocation15], %s898
        %s900 = sand.u32 %s238, 1
        %s901 = smul.addr %s900, 8
        %s902 = scalar_lea.vmem [#allocation16], %s901
        // Predicated region
        $region65: #{tpu_custom_call.1} parent=47 // pred_check
          %p903 = pneg %p248
        $region66: #{tpu_custom_call.1} parent=47 // pred_check_branch
          %905 = sbr.rel (%p903) target = $region68
        $region67: #{tpu_custom_call.1} parent=47 // pred_region
          %s907 = ssub.s32 128, 128
          %908 = vsyncadd %s899, %s907
          %s909 = smul.addr %s46, 128
          %s910 = scalar_lea.hbm %s9, %s909
          %s912 = sshll.u32 %s902, 4
          %s913 = int_to_ptr.vmem [resolvable:$true] %s912
          %915 = dma.vmem_to_hbm [thread:$0]  %s913, 128, %s910, %s899
        $region68: #{tpu_custom_call.1} parent=47 // pred_fallthru
          _
      $region48: #{tpu_custom_call.1} parent=5 // pred_fallthru
        _
      %p916 = scmp.le.s32.totalorder 2, %s37
      // Predicated region
      $region69: #{tpu_custom_call.1} parent=5 // pred_check
        %p917 = pneg %p916
      $region70: #{tpu_custom_call.1} parent=5 // pred_check_branch
        %919 = sbr.rel (%p917) target = $region72
      $region71: #{tpu_custom_call.1} parent=5 // pred_region
        %s920 = ssub.s32 %s37, 2
        // Predicated region
        $region73: #{tpu_custom_call.1} parent=71 // pred_check
          %p921 = pneg %p254
        $region74: #{tpu_custom_call.1} parent=71 // pred_check_branch
          %923 = sbr.rel (%p921) target = $region76
        $region75: #{tpu_custom_call.1} parent=71 // pred_region
          %s924 = sand.u32 %s239, 1
          %s925 = scalar_lea.sflag [#allocation15], %s924
          %s926 = sand.u32 %s239, 1
          %s927 = smul.addr %s926, 8
          %s928 = scalar_lea.vmem [#allocation16], %s927
          %929 = dma.done %s925, 128
        $region76: #{tpu_custom_call.1} parent=71 // pred_fallthru
          _
      $region72: #{tpu_custom_call.1} parent=5 // pred_fallthru
        _
    $region6: #{tpu_custom_call.1} parent=1 // loop_footer
      %s41 = sadd.s32 1, %s37
    $region7: #{tpu_custom_call.1} parent=1 // loop_footer_branch
      %36 = sbr.rel target = $region3
    $region8: #{tpu_custom_call.1} parent=1 // loop_exit
      _
    %930 = vsyncpa [#allocation14], 1
    %s931 = scalar_lea.sflag [#allocation14], 1
    %932 = vsyncpa %s931, 1
    %933 = vsyncpa [#allocation15], 1
    %s934 = scalar_lea.sflag [#allocation15], 1
    %935 = vsyncpa %s934, 1

</llo_original>
